<compile_context>
chip_gen: v5e
topology: v5e:2x2
jax: 0.10.0
libtpu: 0.0.40
codegen_flags: <defaults>
</compile_context>

<pallas_src>
import functools

import jax
import jax.numpy as jnp
import numpy as np
from jax.experimental import pallas as pl
from jax.experimental.pallas import tpu as pltpu

_BN_EPS = 1e-5


def _round_up(n, m):
    return ((n + m - 1) // m) * m


# ----------------------------- Pallas kernel --------------------------------

def _softplus(v):
    # numerically stable log(1 + exp(v)) == max(v,0) + log(1 + exp(-|v|))
    return jnp.maximum(v, 0.0) + jnp.log(1.0 + jnp.exp(-jnp.abs(v)))


def _softmax_rows(v):
    m = jnp.max(v, axis=1, keepdims=True)
    e = jnp.exp(v - m)
    return e * pl.reciprocal(jnp.sum(e, axis=1, keepdims=True), approx=True)


def vae_forward_kernel(x_ref,
                       w1_ref, b1_ref,
                       w2_ref, b2_ref,
                       wms_ref, bms_ref,
                       eps_ref,
                       wg_ref, bg_ref,
                       recon_ref,
                       *, num_topic, padded_topic):
    def linear(h_f32, w_ref, b_ref):
        # bf16 operands, f32 accumulation on the MXU; bias add in f32.
        return jnp.dot(h_f32.astype(jnp.bfloat16), w_ref[...],
                       preferred_element_type=jnp.float32) + b_ref[...]

    x = x_ref[...]

    # ---- encoder (bn=False branch) ----
    en1 = _softplus(linear(x, w1_ref, b1_ref))
    en2 = _softplus(linear(en1, w2_ref, b2_ref))

    # ---- fused miu / sigma projection ----
    ms = linear(en2, wms_ref, bms_ref)
    miu = ms[:, :padded_topic]
    sigma = ms[:, padded_topic:]

    # ---- reparameterization + topic proportions (dropout eval-mode = identity) ----
    z = miu + jnp.exp(0.5 * sigma) * eps_ref[...]        # eps broadcasts (1,Kp)->(TB,Kp)
    if num_topic != padded_topic:
        lane = jax.lax.broadcasted_iota(jnp.int32, z.shape, 1)
        z = jnp.where(lane < num_topic, z, -jnp.inf)     # mask padded topic lanes
    p = _softmax_rows(z)

    # ---- decoder (BatchNorm eval scale already folded into wg/bg) ----
    recon_ref[...] = _softmax_rows(linear(p, wg_ref, bg_ref))


# ------------------------------ wrapper --------------------------------------

def standard_vae_forward(x, kparams, eps, *, max_tile_batch=256):
    """x: (B, dimX) f32. kparams: output of prepare_kernel_params. eps: (1, K) f32."""
    B, dimX = x.shape
    K = kparams["num_topic"]
    Kp = kparams["padded_topic"]

    # --- batch tile: multiple of 8 sublanes; pad B up to a multiple of TB ---
    TB = _round_up(B, 8) if B <= max_tile_batch else max_tile_batch
    Bp = _round_up(B, TB)
    if Bp != B:
        x = jnp.pad(x, ((0, Bp - B), (0, 0)))
    if eps.shape[1] != Kp:
        eps = jnp.pad(eps, ((0, 0), (0, Kp - eps.shape[1])))

    w1, b1 = kparams["w1"], kparams["b1"]
    w2, b2 = kparams["w2"], kparams["b2"]
    wms, bms = kparams["wms"], kparams["bms"]
    wg, bg = kparams["wg"], kparams["bg"]

    def resident(a):  # weights/biases/eps stay pinned in VMEM across grid steps
        nd = a.ndim
        return pl.BlockSpec(a.shape, lambda i, _nd=nd: (0,) * _nd)

    batch_spec = pl.BlockSpec((TB, dimX), lambda i: (i, 0))

    # rough VMEM budget: double-buffered activation blocks + resident params + intermediates,
    # clamped under v7x's 64 MiB physical VMEM.
    act_bytes = 2 * 2 * TB * dimX * 4
    param_bytes = 2 * sum(int(np.prod(a.shape)) * a.dtype.itemsize
                          for a in (w1, b1, w2, b2, wms, bms, wg, bg, eps))
    inter_bytes = TB * (w1.shape[1] + w2.shape[1] + 4 * Kp + dimX) * 4
    vmem_limit = int(min(max(16 * 2**20, 2 * (act_bytes + param_bytes + inter_bytes)),
                         48 * 2**20))

    kernel = functools.partial(vae_forward_kernel, num_topic=K, padded_topic=Kp)
    recon = pl.pallas_call(
        kernel,
        out_shape=jax.ShapeDtypeStruct((Bp, dimX), jnp.float32),
        grid=(Bp // TB,),
        in_specs=[batch_spec,
                  resident(w1), resident(b1),
                  resident(w2), resident(b2),
                  resident(wms), resident(bms),
                  resident(eps),
                  resident(wg), resident(bg)],
        out_specs=batch_spec,
        compiler_params=pltpu.CompilerParams(
            dimension_semantics=("parallel",),
            vmem_limit_bytes=vmem_limit),
    )(x, w1, b1, w2, b2, wms, bms, eps, wg, bg)
    return recon[:B]


# --------------------------- parameter setup ---------------------------------

def _linear_params(key, fan_in, fan_out):
    """PyTorch nn.Linear default init: U(-1/sqrt(fan_in), 1/sqrt(fan_in)); stored as (in, out)."""
    kw, kb = jax.random.split(key)
    bound = 1.0 / np.sqrt(fan_in)
    w = jax.random.uniform(kw, (fan_in, fan_out), jnp.float32, -bound, bound)
    b = jax.random.uniform(kb, (1, fan_out), jnp.float32, -bound, bound)
    return w, b


def make_params(key, dimX, h1, h2, num_topic):
    ks = jax.random.split(key, 5)
    w1, b1 = _linear_params(ks[0], dimX, h1)            # fcEn1
    w2, b2 = _linear_params(ks[1], h1, h2)              # fcEn2
    wmu, bmu = _linear_params(ks[2], h2, num_topic)     # fcMiu
    wsg, bsg = _linear_params(ks[3], h2, num_topic)     # fcSigma
    wg, bg = _linear_params(ks[4], num_topic, dimX)     # decoder fcG1 (initMult = 0)
    return dict(w1=w1, b1=b1, w2=w2, b2=b2, wmu=wmu, bmu=bmu,
                wsg=wsg, bsg=bsg, wg=wg, bg=bg)


def prepare_kernel_params(params, num_topic):
    """Pad hidden/topic dims to 128-lane multiples, fuse miu/sigma projections,
    fold the BatchNorm eval scale into the decoder weights, cast matmul weights to bf16."""
    dimX, H1 = params["w1"].shape
    H2 = params["w2"].shape[1]
    K = num_topic
    H1p, H2p, Kp = _round_up(H1, 128), _round_up(H2, 128), _round_up(K, 128)

    def pad2(a, r, c):
        return jnp.pad(a, ((0, r - a.shape[0]), (0, c - a.shape[1])))

    bn_scale = np.float32(1.0 / np.sqrt(1.0 + _BN_EPS))

    wms = jnp.concatenate([pad2(params["wmu"], H2p, Kp),
                           pad2(params["wsg"], H2p, Kp)], axis=1)
    bms = jnp.concatenate([pad2(params["bmu"], 1, Kp),
                           pad2(params["bsg"], 1, Kp)], axis=1)

    return dict(
        w1=pad2(params["w1"], dimX, H1p).astype(jnp.bfloat16),
        b1=pad2(params["b1"], 1, H1p),
        w2=pad2(params["w2"], H1p, H2p).astype(jnp.bfloat16),
        b2=pad2(params["b2"], 1, H2p),
        wms=wms.astype(jnp.bfloat16),
        bms=bms,
        wg=(pad2(params["wg"], Kp, dimX) * bn_scale).astype(jnp.bfloat16),
        bg=params["bg"] * bn_scale,
        num_topic=K,
        padded_topic=Kp,
    )


# --------------------------- pure-JAX reference -------------------------------

def reference_forward(x, p_, eps):
    lin = lambda h, w, b: h @ w + b
    sp = lambda v: jnp.maximum(v, 0.0) + jnp.log1p(jnp.exp(-jnp.abs(v)))
    en1 = sp(lin(x, p_["w1"], p_["b1"]))
    en2 = sp(lin(en1, p_["w2"], p_["b2"]))
    miu = lin(en2, p_["wmu"], p_["bmu"])
    sigma = lin(en2, p_["wsg"], p_["bsg"])
    z = miu + jnp.sqrt(jnp.exp(sigma)) * eps
    p = jax.nn.softmax(z, axis=1)
    h = lin(p, p_["wg"], p_["bg"]) / jnp.sqrt(1.0 + _BN_EPS)
    return jax.nn.softmax(h, axis=1)


# --------------------------------- main ---------------------------------------

if __name__ == "__main__":
    # synthetic net_arch: hiddenUnit1=64, hiddenUnit2=64, initMult=0, gpu=False
    B, dimX, H1, H2, K = 8, 128, 64, 64, 32

    root = jax.random.PRNGKey(0)
    k_x, k_eps, k_par = jax.random.split(root, 3)

    x = jax.random.uniform(k_x, (B, dimX), jnp.float32)     # e.g. BoW counts >= 0
    eps = jax.random.normal(k_eps, (1, K), jnp.float32)     # torch.randn(1, dimZ)
    params = make_params(k_par, dimX, H1, H2, K)
    kparams = prepare_kernel_params(params, K)

    recon = standard_vae_forward(x, kparams, eps)
    recon = jax.block_until_ready(recon)

    ref = reference_forward(x, params, eps)
    assert recon.shape == (B, dimX) and recon.dtype == jnp.float32
    # bf16 matmul operands + approx reciprocal -> loosened tolerances vs the f32 reference.
    np.testing.assert_allclose(np.asarray(recon), np.asarray(ref), rtol=5e-2, atol=2e-4)
    # rows of a softmax must sum to 1 (up to approx-reciprocal error)
    np.testing.assert_allclose(np.asarray(recon).sum(axis=1), np.ones(B), rtol=5e-3)

    print("KERNEL_OK")
</pallas_src>

<mosaic_0001>
module attributes {stable_mosaic.version = 11 : i64} {
  func.func @vae_forward_kernel(%arg0: i32, %arg1: memref<8x128xf32, #tpu.memory_space<vmem>>, %arg2: memref<128x128xbf16, #tpu.memory_space<vmem>>, %arg3: memref<1x128xf32, #tpu.memory_space<vmem>>, %arg4: memref<128x128xbf16, #tpu.memory_space<vmem>>, %arg5: memref<1x128xf32, #tpu.memory_space<vmem>>, %arg6: memref<128x256xbf16, #tpu.memory_space<vmem>>, %arg7: memref<1x256xf32, #tpu.memory_space<vmem>>, %arg8: memref<1x128xf32, #tpu.memory_space<vmem>>, %arg9: memref<128x128xbf16, #tpu.memory_space<vmem>>, %arg10: memref<1x128xf32, #tpu.memory_space<vmem>>, %arg11: memref<8x128xf32, #tpu.memory_space<vmem>>) attributes {dimension_semantics = [#tpu.dimension_semantics<parallel>], iteration_bounds = array<i64: 1>, scalar_prefetch = 0 : i64, scratch_operands = 0 : i64, tpu.core_type = #tpu.core_type<tc>, window_params = [{transform_indices = @transform_0, window_bounds = array<i64: 8, 128>}, {pipeline_mode = #tpu.pipeline_mode<synchronous>, transform_indices = @transform_1, window_bounds = array<i64: 128, 128>}, {pipeline_mode = #tpu.pipeline_mode<synchronous>, transform_indices = @transform_2, window_bounds = array<i64: 1, 128>}, {pipeline_mode = #tpu.pipeline_mode<synchronous>, transform_indices = @transform_3, window_bounds = array<i64: 128, 128>}, {pipeline_mode = #tpu.pipeline_mode<synchronous>, transform_indices = @transform_4, window_bounds = array<i64: 1, 128>}, {pipeline_mode = #tpu.pipeline_mode<synchronous>, transform_indices = @transform_5, window_bounds = array<i64: 128, 256>}, {pipeline_mode = #tpu.pipeline_mode<synchronous>, transform_indices = @transform_6, window_bounds = array<i64: 1, 256>}, {pipeline_mode = #tpu.pipeline_mode<synchronous>, transform_indices = @transform_7, window_bounds = array<i64: 1, 128>}, {pipeline_mode = #tpu.pipeline_mode<synchronous>, transform_indices = @transform_8, window_bounds = array<i64: 128, 128>}, {pipeline_mode = #tpu.pipeline_mode<synchronous>, transform_indices = @transform_9, window_bounds = array<i64: 1, 128>}, {transform_indices = @transform_10, window_bounds = array<i64: 8, 128>}]} {
    %c0 = arith.constant 0 : index
    %c0_0 = arith.constant 0 : index
    %0 = vector.load %arg1[%c0, %c0_0] : memref<8x128xf32, #tpu.memory_space<vmem>>, vector<8x128xf32>
    %1 = arith.truncf %0 : vector<8x128xf32> to vector<8x128xbf16>
    %c0_1 = arith.constant 0 : index
    %c0_2 = arith.constant 0 : index
    %2 = vector.load %arg2[%c0_1, %c0_2] : memref<128x128xbf16, #tpu.memory_space<vmem>>, vector<128x128xbf16>
    %cst = arith.constant dense<0.000000e+00> : vector<8x128xf32>
    %3 = tpu.matmul %1, %2, %cst {dimension_numbers = #tpu.dot_dimension_numbers<[1], [0], [0], [1], [0, 0, 1, 1], [], []>} : vector<8x128xbf16>, vector<128x128xbf16>, vector<8x128xf32> -> vector<8x128xf32>
    %c0_3 = arith.constant 0 : index
    %c0_4 = arith.constant 0 : index
    %4 = vector.load %arg3[%c0_3, %c0_4] : memref<1x128xf32, #tpu.memory_space<vmem>>, vector<1x128xf32>
    %5 = vector.broadcast %4 : vector<1x128xf32> to vector<8x128xf32>
    %6 = arith.addf %3, %5 : vector<8x128xf32>
    %cst_5 = arith.constant 0.000000e+00 : f32
    %7 = vector.broadcast %cst_5 : f32 to vector<8x128xf32>
    %8 = arith.maximumf %6, %7 : vector<8x128xf32>
    %9 = math.absf %6 : vector<8x128xf32>
    %cst_6 = arith.constant 0.000000e+00 : f32
    %10 = vector.broadcast %cst_6 : f32 to vector<8x128xf32>
    %11 = arith.subf %10, %9 : vector<8x128xf32>
    %12 = math.exp %11 : vector<8x128xf32>
    %cst_7 = arith.constant 1.000000e+00 : f32
    %13 = vector.broadcast %cst_7 : f32 to vector<8x128xf32>
    %14 = arith.addf %13, %12 : vector<8x128xf32>
    %15 = math.log %14 : vector<8x128xf32>
    %16 = arith.addf %8, %15 : vector<8x128xf32>
    %17 = arith.truncf %16 : vector<8x128xf32> to vector<8x128xbf16>
    %c0_8 = arith.constant 0 : index
    %c0_9 = arith.constant 0 : index
    %18 = vector.load %arg4[%c0_8, %c0_9] : memref<128x128xbf16, #tpu.memory_space<vmem>>, vector<128x128xbf16>
    %cst_10 = arith.constant dense<0.000000e+00> : vector<8x128xf32>
    %19 = tpu.matmul %17, %18, %cst_10 {dimension_numbers = #tpu.dot_dimension_numbers<[1], [0], [0], [1], [0, 0, 1, 1], [], []>} : vector<8x128xbf16>, vector<128x128xbf16>, vector<8x128xf32> -> vector<8x128xf32>
    %c0_11 = arith.constant 0 : index
    %c0_12 = arith.constant 0 : index
    %20 = vector.load %arg5[%c0_11, %c0_12] : memref<1x128xf32, #tpu.memory_space<vmem>>, vector<1x128xf32>
    %21 = vector.broadcast %20 : vector<1x128xf32> to vector<8x128xf32>
    %22 = arith.addf %19, %21 : vector<8x128xf32>
    %cst_13 = arith.constant 0.000000e+00 : f32
    %23 = vector.broadcast %cst_13 : f32 to vector<8x128xf32>
    %24 = arith.maximumf %22, %23 : vector<8x128xf32>
    %25 = math.absf %22 : vector<8x128xf32>
    %cst_14 = arith.constant 0.000000e+00 : f32
    %26 = vector.broadcast %cst_14 : f32 to vector<8x128xf32>
    %27 = arith.subf %26, %25 : vector<8x128xf32>
    %28 = math.exp %27 : vector<8x128xf32>
    %cst_15 = arith.constant 1.000000e+00 : f32
    %29 = vector.broadcast %cst_15 : f32 to vector<8x128xf32>
    %30 = arith.addf %29, %28 : vector<8x128xf32>
    %31 = math.log %30 : vector<8x128xf32>
    %32 = arith.addf %24, %31 : vector<8x128xf32>
    %33 = arith.truncf %32 : vector<8x128xf32> to vector<8x128xbf16>
    %c0_16 = arith.constant 0 : index
    %c0_17 = arith.constant 0 : index
    %34 = vector.load %arg6[%c0_16, %c0_17] : memref<128x256xbf16, #tpu.memory_space<vmem>>, vector<128x256xbf16>
    %cst_18 = arith.constant dense<0.000000e+00> : vector<8x256xf32>
    %35 = tpu.matmul %33, %34, %cst_18 {dimension_numbers = #tpu.dot_dimension_numbers<[1], [0], [0], [1], [0, 0, 1, 1], [], []>} : vector<8x128xbf16>, vector<128x256xbf16>, vector<8x256xf32> -> vector<8x256xf32>
    %c0_19 = arith.constant 0 : index
    %c0_20 = arith.constant 0 : index
    %36 = vector.load %arg7[%c0_19, %c0_20] : memref<1x256xf32, #tpu.memory_space<vmem>>, vector<1x256xf32>
    %37 = vector.broadcast %36 : vector<1x256xf32> to vector<8x256xf32>
    %38 = arith.addf %35, %37 : vector<8x256xf32>
    %39 = vector.extract_strided_slice %38 {offsets = [0, 0], sizes = [8, 128], strides = [1, 1]} : vector<8x256xf32> to vector<8x128xf32>
    %40 = vector.extract_strided_slice %38 {offsets = [0, 128], sizes = [8, 128], strides = [1, 1]} : vector<8x256xf32> to vector<8x128xf32>
    %cst_21 = arith.constant 5.000000e-01 : f32
    %41 = vector.broadcast %cst_21 : f32 to vector<8x128xf32>
    %42 = arith.mulf %41, %40 : vector<8x128xf32>
    %43 = math.exp %42 : vector<8x128xf32>
    %c0_22 = arith.constant 0 : index
    %c0_23 = arith.constant 0 : index
    %44 = vector.load %arg8[%c0_22, %c0_23] : memref<1x128xf32, #tpu.memory_space<vmem>>, vector<1x128xf32>
    %45 = vector.broadcast %44 : vector<1x128xf32> to vector<8x128xf32>
    %46 = arith.mulf %43, %45 : vector<8x128xf32>
    %47 = arith.addf %39, %46 : vector<8x128xf32>
    %48 = tpu.iota {dimensions = array<i32: 1>} : vector<8x128xi32>
    %c32_i32 = arith.constant 32 : i32
    %49 = vector.broadcast %c32_i32 : i32 to vector<8x128xi32>
    %50 = arith.cmpi slt, %48, %49 : vector<8x128xi32>
    %cst_24 = arith.constant 0xFF800000 : f32
    %51 = vector.broadcast %cst_24 : f32 to vector<8x128xf32>
    %52 = arith.select %50, %47, %51 : vector<8x128xi1>, vector<8x128xf32>
    %cst_25 = arith.constant dense<0xFF800000> : vector<8xf32>
    %53 = vector.multi_reduction <maximumf>, %52, %cst_25 [1] : vector<8x128xf32> to vector<8xf32>
    %54 = vector.shape_cast %53 : vector<8xf32> to vector<8x1xf32>
    %55 = vector.broadcast %54 : vector<8x1xf32> to vector<8x128xf32>
    %56 = arith.subf %52, %55 : vector<8x128xf32>
    %57 = math.exp %56 : vector<8x128xf32>
    %cst_26 = arith.constant dense<0.000000e+00> : vector<8xf32>
    %58 = vector.multi_reduction <add>, %57, %cst_26 [1] : vector<8x128xf32> to vector<8xf32>
    %59 = vector.shape_cast %58 : vector<8xf32> to vector<8x1xf32>
    %60 = tpu.reciprocal %59 {approx = true} : vector<8x1xf32> -> vector<8x1xf32>
    %61 = vector.broadcast %60 : vector<8x1xf32> to vector<8x128xf32>
    %62 = arith.mulf %57, %61 : vector<8x128xf32>
    %63 = arith.truncf %62 : vector<8x128xf32> to vector<8x128xbf16>
    %c0_27 = arith.constant 0 : index
    %c0_28 = arith.constant 0 : index
    %64 = vector.load %arg9[%c0_27, %c0_28] : memref<128x128xbf16, #tpu.memory_space<vmem>>, vector<128x128xbf16>
    %cst_29 = arith.constant dense<0.000000e+00> : vector<8x128xf32>
    %65 = tpu.matmul %63, %64, %cst_29 {dimension_numbers = #tpu.dot_dimension_numbers<[1], [0], [0], [1], [0, 0, 1, 1], [], []>} : vector<8x128xbf16>, vector<128x128xbf16>, vector<8x128xf32> -> vector<8x128xf32>
    %c0_30 = arith.constant 0 : index
    %c0_31 = arith.constant 0 : index
    %66 = vector.load %arg10[%c0_30, %c0_31] : memref<1x128xf32, #tpu.memory_space<vmem>>, vector<1x128xf32>
    %67 = vector.broadcast %66 : vector<1x128xf32> to vector<8x128xf32>
    %68 = arith.addf %65, %67 : vector<8x128xf32>
    %cst_32 = arith.constant dense<0xFF800000> : vector<8xf32>
    %69 = vector.multi_reduction <maximumf>, %68, %cst_32 [1] : vector<8x128xf32> to vector<8xf32>
    %70 = vector.shape_cast %69 : vector<8xf32> to vector<8x1xf32>
    %71 = vector.broadcast %70 : vector<8x1xf32> to vector<8x128xf32>
    %72 = arith.subf %68, %71 : vector<8x128xf32>
    %73 = math.exp %72 : vector<8x128xf32>
    %cst_33 = arith.constant dense<0.000000e+00> : vector<8xf32>
    %74 = vector.multi_reduction <add>, %73, %cst_33 [1] : vector<8x128xf32> to vector<8xf32>
    %75 = vector.shape_cast %74 : vector<8xf32> to vector<8x1xf32>
    %76 = tpu.reciprocal %75 {approx = true} : vector<8x1xf32> -> vector<8x1xf32>
    %77 = vector.broadcast %76 : vector<8x1xf32> to vector<8x128xf32>
    %78 = arith.mulf %73, %77 : vector<8x128xf32>
    %c0_34 = arith.constant 0 : index
    %c0_35 = arith.constant 0 : index
    %79 = vector.load %arg11[%c0_34, %c0_35] : memref<8x128xf32, #tpu.memory_space<vmem>>, vector<8x128xf32>
    tpu.vector_store %arg11[%c0_34, %c0_35], %78 {strides = array<i32>} : memref<8x128xf32, #tpu.memory_space<vmem>>, vector<8x128xf32>,
    return
  }
  func.func @transform_0(%arg0: i32) -> (i32, i32) {
    %c0_i32 = arith.constant 0 : i32
    %c0_i32_0 = arith.constant 0 : i32
    return %arg0, %c0_i32 : i32, i32
  }
  func.func @transform_1(%arg0: i32) -> (i32, i32) {
    %c0_i32 = arith.constant 0 : i32
    %c0_i32_0 = arith.constant 0 : i32
    %c0_i32_1 = arith.constant 0 : i32
    return %c0_i32, %c0_i32_0 : i32, i32
  }
  func.func @transform_2(%arg0: i32) -> (i32, i32) {
    %c0_i32 = arith.constant 0 : i32
    %c0_i32_0 = arith.constant 0 : i32
    %c0_i32_1 = arith.constant 0 : i32
    return %c0_i32, %c0_i32_0 : i32, i32
  }
  func.func @transform_3(%arg0: i32) -> (i32, i32) {
    %c0_i32 = arith.constant 0 : i32
    %c0_i32_0 = arith.constant 0 : i32
    %c0_i32_1 = arith.constant 0 : i32
    return %c0_i32, %c0_i32_0 : i32, i32
  }
  func.func @transform_4(%arg0: i32) -> (i32, i32) {
    %c0_i32 = arith.constant 0 : i32
    %c0_i32_0 = arith.constant 0 : i32
    %c0_i32_1 = arith.constant 0 : i32
    return %c0_i32, %c0_i32_0 : i32, i32
  }
  func.func @transform_5(%arg0: i32) -> (i32, i32) {
    %c0_i32 = arith.constant 0 : i32
    %c0_i32_0 = arith.constant 0 : i32
    %c0_i32_1 = arith.constant 0 : i32
    return %c0_i32, %c0_i32_0 : i32, i32
  }
  func.func @transform_6(%arg0: i32) -> (i32, i32) {
    %c0_i32 = arith.constant 0 : i32
    %c0_i32_0 = arith.constant 0 : i32
    %c0_i32_1 = arith.constant 0 : i32
    return %c0_i32, %c0_i32_0 : i32, i32
  }
  func.func @transform_7(%arg0: i32) -> (i32, i32) {
    %c0_i32 = arith.constant 0 : i32
    %c0_i32_0 = arith.constant 0 : i32
    %c0_i32_1 = arith.constant 0 : i32
    return %c0_i32, %c0_i32_0 : i32, i32
  }
  func.func @transform_8(%arg0: i32) -> (i32, i32) {
    %c0_i32 = arith.constant 0 : i32
    %c0_i32_0 = arith.constant 0 : i32
    %c0_i32_1 = arith.constant 0 : i32
    return %c0_i32, %c0_i32_0 : i32, i32
  }
  func.func @transform_9(%arg0: i32) -> (i32, i32) {
    %c0_i32 = arith.constant 0 : i32
    %c0_i32_0 = arith.constant 0 : i32
    %c0_i32_1 = arith.constant 0 : i32
    return %c0_i32, %c0_i32_0 : i32, i32
  }
  func.func @transform_10(%arg0: i32) -> (i32, i32) {
    %c0_i32 = arith.constant 0 : i32
    %c0_i32_0 = arith.constant 0 : i32
    return %arg0, %c0_i32 : i32, i32
  }
}

</mosaic_0001>

<llo_original>
// kernel: tpu_custom_call.1
$region0: #{tpu_custom_call.1}
  #allocation0 [shape = 'u32[]', space=smem, size = 0x4, offset = 0x4, fixed_abs, tag = 'smem constant byte address 0x4 - core index']
  #allocation1 [shape = 'u32[72,128]{1,0:T(1,128)}', space=vmem, size = 0x9000, scoped, tag = 'internal scratch']
  %s0 = inlined_call_operand.hbm [shape: f32[8,128], index: 0, kind: input, shape index: {}]
  %s1 = inlined_call_operand.hbm [shape: bf16[128,128], index: 1, kind: input, shape index: {}]
  %s2 = inlined_call_operand.vmem [shape: f32[1,128], index: 2, kind: input, shape index: {}]
  %s3 = inlined_call_operand.hbm [shape: bf16[128,128], index: 3, kind: input, shape index: {}]
  %s4 = inlined_call_operand.hbm [shape: f32[1,128], index: 4, kind: input, shape index: {}]
  %s5 = inlined_call_operand.hbm [shape: bf16[128,256], index: 5, kind: input, shape index: {}]
  %s6 = inlined_call_operand.vmem [shape: f32[1,256], index: 6, kind: input, shape index: {}]
  %s7 = inlined_call_operand.vmem [shape: f32[1,128], index: 7, kind: input, shape index: {}]
  %s8 = inlined_call_operand.hbm [shape: bf16[128,128], index: 8, kind: input, shape index: {}]
  %s9 = inlined_call_operand.vmem [shape: f32[1,128], index: 9, kind: input, shape index: {}]
  %s10 = inlined_call_operand.hbm [shape: f32[8,128], index: 10, kind: output, shape index: {}]
  %s11 = sld [smem:[#allocation0]]
  $region74: #{tpu_custom_call.1} parent=0
    _
  %s13 = ssub.s32 1, %s11
  %s14 = scalar_select 0, %s13, %s11
  $region1: #{tpu_custom_call.1} parent=0
    #allocation2 [shape = 'u8[4096]{0}', space=vmem, size = 0x1000, scoped, tag = 'input window, operand 0, single buffered']
    #allocation3 [shape = 's32[1]{0}', space=sflag, size = 0x4, scoped, tag = 'scoped memory for tpu_custom_call.1']
    #allocation4 [shape = 's32[1]{0}', space=sflag, size = 0x4, scoped, tag = 'scoped memory for tpu_custom_call.1']
    #allocation5 [shape = 'u8[32768]{0}', space=vmem, size = 0x8000, scoped, tag = 'input window, operand 1, single buffered']
    #allocation6 [shape = 's32[1]{0}', space=sflag, size = 0x4, scoped, tag = 'scoped memory for tpu_custom_call.1']
    #allocation7 [shape = 'u8[32768]{0}', space=vmem, size = 0x8000, scoped, tag = 'input window, operand 3, single buffered']
    #allocation8 [shape = 'u8[512]{0}', space=vmem, size = 0x400, scoped, tag = 'input window, operand 4, single buffered']
    #allocation9 [shape = 's32[1]{0}', space=sflag, size = 0x4, scoped, tag = 'scoped memory for tpu_custom_call.1']
    #allocation10 [shape = 'u8[65536]{0}', space=vmem, size = 0x10000, scoped, tag = 'input window, operand 5, single buffered']
    #allocation11 [shape = 'u8[32768]{0}', space=vmem, size = 0x8000, scoped, tag = 'input window, operand 8, single buffered']
    #allocation12 [shape = 's32[1]{0}', space=sflag, size = 0x4, scoped, tag = 'scoped memory for tpu_custom_call.1']
    #allocation13 [shape = 'u8[4096]{0}', space=vmem, size = 0x1000, scoped, tag = 'output window, operand 0, single buffered']
    %15 = vsyncpa [#allocation3], 0
    %16 = vsyncpa [#allocation6], 0
    %17 = vsyncpa [#allocation9], 0
    %18 = vsyncpa [#allocation12], 0
    %19 = vsyncpa [#allocation4], 0
    // Predicated region
    $region2: #{tpu_custom_call.1} parent=1 // pred_check
      _
    $region3: #{tpu_custom_call.1} parent=1 // pred_check_branch
      %21 = sbr.rel (0) target = $region5
    $region4: #{tpu_custom_call.1} parent=1 // pred_region
      %23 = vsyncadd [#allocation3], 0
      %s25 = sshll.u32 %s0, 4
      %s26 = int_to_ptr.hbm [resolvable:$true] %s25
      %s27 = sshll.u32 [#allocation2], 4
      %s28 = int_to_ptr.vmem [resolvable:$true] %s27
      %30 = dma.hbm_to_vmem [thread:$0]  %s26, 128, %s28, [#allocation3]
    $region5: #{tpu_custom_call.1} parent=1 // pred_fallthru
      _
    // Predicated region
    $region6: #{tpu_custom_call.1} parent=1 // pred_check
      _
    $region7: #{tpu_custom_call.1} parent=1 // pred_check_branch
      %32 = sbr.rel (0) target = $region9
    $region8: #{tpu_custom_call.1} parent=1 // pred_region
      %34 = vsyncadd [#allocation6], 0
      %s35 = sshll.u32 %s1, 4
      %s36 = int_to_ptr.hbm [resolvable:$true] %s35
      %s37 = sshll.u32 [#allocation5], 4
      %s38 = int_to_ptr.vmem [resolvable:$true] %s37
      %43 = dma.hbm_to_vmem [thread:$0]  %s36, 1024, %s38, [#allocation6], 64, 64, 4
    $region9: #{tpu_custom_call.1} parent=1 // pred_fallthru
      _
    // Predicated region
    $region10: #{tpu_custom_call.1} parent=1 // pred_check
      _
    $region11: #{tpu_custom_call.1} parent=1 // pred_check_branch
      %45 = sbr.rel (0) target = $region13
    $region12: #{tpu_custom_call.1} parent=1 // pred_region
      _
    $region13: #{tpu_custom_call.1} parent=1 // pred_fallthru
      _
    // Predicated region
    $region14: #{tpu_custom_call.1} parent=1 // pred_check
      _
    $region15: #{tpu_custom_call.1} parent=1 // pred_check_branch
      %47 = sbr.rel (0) target = $region17
    $region16: #{tpu_custom_call.1} parent=1 // pred_region
      %49 = vsyncadd [#allocation6], 0
      %s50 = sshll.u32 %s3, 4
      %s51 = int_to_ptr.hbm [resolvable:$true] %s50
      %s52 = sshll.u32 [#allocation7], 4
      %s53 = int_to_ptr.vmem [resolvable:$true] %s52
      %58 = dma.hbm_to_vmem [thread:$0]  %s51, 1024, %s53, [#allocation6], 64, 64, 4
    $region17: #{tpu_custom_call.1} parent=1 // pred_fallthru
      _
    // Predicated region
    $region18: #{tpu_custom_call.1} parent=1 // pred_check
      _
    $region19: #{tpu_custom_call.1} parent=1 // pred_check_branch
      %60 = sbr.rel (0) target = $region21
    $region20: #{tpu_custom_call.1} parent=1 // pred_region
      %62 = vsyncadd [#allocation9], 0
      %s64 = sshll.u32 %s4, 4
      %s65 = int_to_ptr.hbm [resolvable:$true] %s64
      %s66 = sshll.u32 [#allocation8], 4
      %s67 = int_to_ptr.vmem [resolvable:$true] %s66
      %69 = dma.hbm_to_vmem [thread:$0]  %s65, 16, %s67, [#allocation9]
    $region21: #{tpu_custom_call.1} parent=1 // pred_fallthru
      _
    // Predicated region
    $region22: #{tpu_custom_call.1} parent=1 // pred_check
      _
    $region23: #{tpu_custom_call.1} parent=1 // pred_check_branch
      %71 = sbr.rel (0) target = $region25
    $region24: #{tpu_custom_call.1} parent=1 // pred_region
      %73 = vsyncadd [#allocation9], 0
      %s74 = sshll.u32 %s5, 4
      %s75 = int_to_ptr.hbm [resolvable:$true] %s74
      %s76 = sshll.u32 [#allocation10], 4
      %s77 = int_to_ptr.vmem [resolvable:$true] %s76
      %82 = dma.hbm_to_vmem [thread:$0]  %s75, 2048, %s77, [#allocation9], 128, 128, 8
    $region25: #{tpu_custom_call.1} parent=1 // pred_fallthru
      _
    // Predicated region
    $region26: #{tpu_custom_call.1} parent=1 // pred_check
      _
    $region27: #{tpu_custom_call.1} parent=1 // pred_check_branch
      %84 = sbr.rel (0) target = $region29
    $region28: #{tpu_custom_call.1} parent=1 // pred_region
      _
    $region29: #{tpu_custom_call.1} parent=1 // pred_fallthru
      _
    // Predicated region
    $region30: #{tpu_custom_call.1} parent=1 // pred_check
      _
    $region31: #{tpu_custom_call.1} parent=1 // pred_check_branch
      %86 = sbr.rel (0) target = $region33
    $region32: #{tpu_custom_call.1} parent=1 // pred_region
      _
    $region33: #{tpu_custom_call.1} parent=1 // pred_fallthru
      _
    // Predicated region
    $region34: #{tpu_custom_call.1} parent=1 // pred_check
      _
    $region35: #{tpu_custom_call.1} parent=1 // pred_check_branch
      %88 = sbr.rel (0) target = $region37
    $region36: #{tpu_custom_call.1} parent=1 // pred_region
      %90 = vsyncadd [#allocation12], 0
      %s91 = sshll.u32 %s8, 4
      %s92 = int_to_ptr.hbm [resolvable:$true] %s91
      %s93 = sshll.u32 [#allocation11], 4
      %s94 = int_to_ptr.vmem [resolvable:$true] %s93
      %99 = dma.hbm_to_vmem [thread:$0]  %s92, 1024, %s94, [#allocation12], 64, 64, 4
    $region37: #{tpu_custom_call.1} parent=1 // pred_fallthru
      _
    // Predicated region
    $region38: #{tpu_custom_call.1} parent=1 // pred_check
      _
    $region39: #{tpu_custom_call.1} parent=1 // pred_check_branch
      %101 = sbr.rel (0) target = $region41
    $region40: #{tpu_custom_call.1} parent=1 // pred_region
      _
    $region41: #{tpu_custom_call.1} parent=1 // pred_fallthru
      _
    // Predicated region
    $region42: #{tpu_custom_call.1} parent=1 // pred_check
      _
    $region43: #{tpu_custom_call.1} parent=1 // pred_check_branch
      %103 = sbr.rel (0) target = $region45
    $region44: #{tpu_custom_call.1} parent=1 // pred_region
      %105 = dma.done [#allocation3], 128
    $region45: #{tpu_custom_call.1} parent=1 // pred_fallthru
      _
    // Predicated region
    $region46: #{tpu_custom_call.1} parent=1 // pred_check
      _
    $region47: #{tpu_custom_call.1} parent=1 // pred_check_branch
      %107 = sbr.rel (0) target = $region49
    $region48: #{tpu_custom_call.1} parent=1 // pred_region
      %109 = dma.done [#allocation6], 1024
    $region49: #{tpu_custom_call.1} parent=1 // pred_fallthru
      _
    // Predicated region
    $region50: #{tpu_custom_call.1} parent=1 // pred_check
      _
    $region51: #{tpu_custom_call.1} parent=1 // pred_check_branch
      %111 = sbr.rel (0) target = $region53
    $region52: #{tpu_custom_call.1} parent=1 // pred_region
      %113 = dma.done [#allocation6], 1024
    $region53: #{tpu_custom_call.1} parent=1 // pred_fallthru
      _
    // Predicated region
    $region54: #{tpu_custom_call.1} parent=1 // pred_check
      _
    $region55: #{tpu_custom_call.1} parent=1 // pred_check_branch
      %115 = sbr.rel (0) target = $region57
    $region56: #{tpu_custom_call.1} parent=1 // pred_region
      %117 = dma.done [#allocation9], 16
    $region57: #{tpu_custom_call.1} parent=1 // pred_fallthru
      _
    // Predicated region
    $region58: #{tpu_custom_call.1} parent=1 // pred_check
      _
    $region59: #{tpu_custom_call.1} parent=1 // pred_check_branch
      %119 = sbr.rel (0) target = $region61
    $region60: #{tpu_custom_call.1} parent=1 // pred_region
      %121 = dma.done [#allocation9], 2048
    $region61: #{tpu_custom_call.1} parent=1 // pred_fallthru
      _
    // Predicated region
    $region62: #{tpu_custom_call.1} parent=1 // pred_check
      _
    $region63: #{tpu_custom_call.1} parent=1 // pred_check_branch
      %123 = sbr.rel (0) target = $region65
    $region64: #{tpu_custom_call.1} parent=1 // pred_region
      %125 = dma.done [#allocation12], 1024
    $region65: #{tpu_custom_call.1} parent=1 // pred_fallthru
      _
    %v126 = vld [vmem:[#allocation2] sm:$0xff]
    %v127 = vpack.c.bf16 %v126, %v126
    %v128 = vld [vmem:[#allocation5] sm:$0xf]
    %v129 = vld [vmem:[#allocation5 + $0x4] sm:$0xf]
    %v130 = vld [vmem:[#allocation5 + $0x8] sm:$0xf]
    %v131 = vld [vmem:[#allocation5 + $0xc] sm:$0xf]
    %v132 = vld [vmem:[#allocation5 + $0x10] sm:$0xf]
    %v133 = vld [vmem:[#allocation5 + $0x14] sm:$0xf]
    %v134 = vld [vmem:[#allocation5 + $0x18] sm:$0xf]
    %v135 = vld [vmem:[#allocation5 + $0x1c] sm:$0xf]
    %v136 = vld [vmem:[#allocation5 + $0x20] sm:$0xf]
    %v137 = vld [vmem:[#allocation5 + $0x24] sm:$0xf]
    %v138 = vld [vmem:[#allocation5 + $0x28] sm:$0xf]
    %v139 = vld [vmem:[#allocation5 + $0x2c] sm:$0xf]
    %v140 = vld [vmem:[#allocation5 + $0x30] sm:$0xf]
    %v141 = vld [vmem:[#allocation5 + $0x34] sm:$0xf]
    %v142 = vld [vmem:[#allocation5 + $0x38] sm:$0xf]
    %v143 = vld [vmem:[#allocation5 + $0x3c] sm:$0xf]
    %v144 = vld [vmem:[%s2] sm:$0x1]
    %v146 = vperm.slane %v144, 0
    %v164 = vunpack.c.l.b16 %v128
    %v165 = vunpack.c.l.b16 %v129
    %v166 = vunpack.c.l.b16 %v130
    %v167 = vunpack.c.l.b16 %v131
    %v168 = vunpack.c.l.b16 %v132
    %v169 = vunpack.c.l.b16 %v133
    %v170 = vunpack.c.l.b16 %v134
    %v171 = vunpack.c.l.b16 %v135
    %v172 = vunpack.c.l.b16 %v136
    %v173 = vunpack.c.l.b16 %v137
    %v174 = vunpack.c.l.b16 %v138
    %v175 = vunpack.c.l.b16 %v139
    %v176 = vunpack.c.l.b16 %v140
    %v177 = vunpack.c.l.b16 %v141
    %v178 = vunpack.c.l.b16 %v142
    %v179 = vunpack.c.l.b16 %v143
    %v180 = vpack.c.b16 %v165, %v164
    %v181 = vpack.c.b16 %v167, %v166
    %v182 = vpack.c.b16 %v169, %v168
    %v183 = vpack.c.b16 %v171, %v170
    %v184 = vpack.c.b16 %v173, %v172
    %v185 = vpack.c.b16 %v175, %v174
    %v186 = vpack.c.b16 %v177, %v176
    %v187 = vpack.c.b16 %v179, %v178
    %196 = vmatpush.bf16.msra.mxu0 %v187
    %197 = vmatpush.bf16.msra.mxu0 %v186
    %198 = vmatpush.bf16.msra.mxu0 %v185
    %199 = vmatpush.bf16.msra.mxu0 %v184
    %200 = vmatpush.bf16.msra.mxu0 %v183
    %201 = vmatpush.bf16.msra.mxu0 %v182
    %202 = vmatpush.bf16.msra.mxu0 %v181
    %203 = vmatpush.bf16.msra.mxu0 %v180
    %204 = vmatmul.bf16.gmra.mxu0 %v127
    %v205 = vpop.f32.mrf.mxu0
    %v206 = vadd.f32 %v146, %v205
    %v207 = vpop.f32.mrf.mxu0
    %208 = vdwg.mxu0
    %v209 = vmax.f32 %v206, 0.0
    %v210 = vand.u32 2147483647, %v206
    %v211 = vsub.f32 0.0, %v210
    %v212 = vmul.f32 %v211, 1.442695
    %v213 = vpow.pop %v212
    %v214 = vadd.f32 %v213, 1.0
    %v215 = vlog2.pop %v214
    %v216 = vmul.f32 %v215, 0.6931472
    %v217 = vadd.f32 %v209, %v216
    %v218 = vpack.c.bf16 %v217, %v217
    %v219 = vld [vmem:[#allocation7] sm:$0xf]
    %v220 = vld [vmem:[#allocation7 + $0x4] sm:$0xf]
    %v221 = vld [vmem:[#allocation7 + $0x8] sm:$0xf]
    %v222 = vld [vmem:[#allocation7 + $0xc] sm:$0xf]
    %v223 = vld [vmem:[#allocation7 + $0x10] sm:$0xf]
    %v224 = vld [vmem:[#allocation7 + $0x14] sm:$0xf]
    %v225 = vld [vmem:[#allocation7 + $0x18] sm:$0xf]
    %v226 = vld [vmem:[#allocation7 + $0x1c] sm:$0xf]
    %v227 = vld [vmem:[#allocation7 + $0x20] sm:$0xf]
    %v228 = vld [vmem:[#allocation7 + $0x24] sm:$0xf]
    %v229 = vld [vmem:[#allocation7 + $0x28] sm:$0xf]
    %v230 = vld [vmem:[#allocation7 + $0x2c] sm:$0xf]
    %v231 = vld [vmem:[#allocation7 + $0x30] sm:$0xf]
    %v232 = vld [vmem:[#allocation7 + $0x34] sm:$0xf]
    %v233 = vld [vmem:[#allocation7 + $0x38] sm:$0xf]
    %v234 = vld [vmem:[#allocation7 + $0x3c] sm:$0xf]
    %v235 = vld [vmem:[#allocation8] sm:$0x1]
    %v237 = vperm.slane %v235, 0
    %v255 = vunpack.c.l.b16 %v219
    %v256 = vunpack.c.l.b16 %v220
    %v257 = vunpack.c.l.b16 %v221
    %v258 = vunpack.c.l.b16 %v222
    %v259 = vunpack.c.l.b16 %v223
    %v260 = vunpack.c.l.b16 %v224
    %v261 = vunpack.c.l.b16 %v225
    %v262 = vunpack.c.l.b16 %v226
    %v263 = vunpack.c.l.b16 %v227
    %v264 = vunpack.c.l.b16 %v228
    %v265 = vunpack.c.l.b16 %v229
    %v266 = vunpack.c.l.b16 %v230
    %v267 = vunpack.c.l.b16 %v231
    %v268 = vunpack.c.l.b16 %v232
    %v269 = vunpack.c.l.b16 %v233
    %v270 = vunpack.c.l.b16 %v234
    %v271 = vpack.c.b16 %v256, %v255
    %v272 = vpack.c.b16 %v258, %v257
    %v273 = vpack.c.b16 %v260, %v259
    %v274 = vpack.c.b16 %v262, %v261
    %v275 = vpack.c.b16 %v264, %v263
    %v276 = vpack.c.b16 %v266, %v265
    %v277 = vpack.c.b16 %v268, %v267
    %v278 = vpack.c.b16 %v270, %v269
    %287 = vmatpush.bf16.msra.mxu0 %v278
    %288 = vmatpush.bf16.msra.mxu0 %v277
    %289 = vmatpush.bf16.msra.mxu0 %v276
    %290 = vmatpush.bf16.msra.mxu0 %v275
    %291 = vmatpush.bf16.msra.mxu0 %v274
    %292 = vmatpush.bf16.msra.mxu0 %v273
    %293 = vmatpush.bf16.msra.mxu0 %v272
    %294 = vmatpush.bf16.msra.mxu0 %v271
    %295 = vmatmul.bf16.gmra.mxu0 %v218
    %v296 = vpop.f32.mrf.mxu0
    %v297 = vadd.f32 %v237, %v296
    %v298 = vpop.f32.mrf.mxu0
    %299 = vdwg.mxu0
    %v300 = vmax.f32 %v297, 0.0
    %v301 = vand.u32 2147483647, %v297
    %v302 = vsub.f32 0.0, %v301
    %v303 = vmul.f32 %v302, 1.442695
    %v304 = vpow.pop %v303
    %v305 = vadd.f32 %v304, 1.0
    %v306 = vlog2.pop %v305
    %v307 = vmul.f32 %v306, 0.6931472
    %v308 = vadd.f32 %v300, %v307
    %v309 = vpack.c.bf16 %v308, %v308
    %v310 = vld [vmem:[#allocation10] sm:$0xff]
    %v311 = vld [vmem:[#allocation10 + $0x8] sm:$0xff]
    %v312 = vld [vmem:[#allocation10 + $0x10] sm:$0xff]
    %v313 = vld [vmem:[#allocation10 + $0x18] sm:$0xff]
    %v314 = vld [vmem:[#allocation10 + $0x20] sm:$0xff]
    %v315 = vld [vmem:[#allocation10 + $0x28] sm:$0xff]
    %v316 = vld [vmem:[#allocation10 + $0x30] sm:$0xff]
    %v317 = vld [vmem:[#allocation10 + $0x38] sm:$0xff]
    %v318 = vld [vmem:[#allocation10 + $0x40] sm:$0xff]
    %v319 = vld [vmem:[#allocation10 + $0x48] sm:$0xff]
    %v320 = vld [vmem:[#allocation10 + $0x50] sm:$0xff]
    %v321 = vld [vmem:[#allocation10 + $0x58] sm:$0xff]
    %v322 = vld [vmem:[#allocation10 + $0x60] sm:$0xff]
    %v323 = vld [vmem:[#allocation10 + $0x68] sm:$0xff]
    %v324 = vld [vmem:[#allocation10 + $0x70] sm:$0xff]
    %v325 = vld [vmem:[#allocation10 + $0x78] sm:$0xff]
    %v326 = vld [vmem:[%s6] sm:$0x3]
    %v328 = vperm.slane %v326, 0
    %v329 = vperm.slane %v326, 1
    %v348 = vunpack.c.l.b16 %v310
    %v349 = vunpack.c.h.b16 %v310
    %v350 = vunpack.c.l.b16 %v311
    %v351 = vunpack.c.h.b16 %v311
    %v352 = vunpack.c.l.b16 %v312
    %v353 = vunpack.c.h.b16 %v312
    %v354 = vunpack.c.l.b16 %v313
    %v355 = vunpack.c.h.b16 %v313
    %v356 = vunpack.c.l.b16 %v314
    %v357 = vunpack.c.h.b16 %v314
    %v358 = vunpack.c.l.b16 %v315
    %v359 = vunpack.c.h.b16 %v315
    %v360 = vunpack.c.l.b16 %v316
    %v361 = vunpack.c.h.b16 %v316
    %v362 = vunpack.c.l.b16 %v317
    %v363 = vunpack.c.h.b16 %v317
    %v364 = vunpack.c.l.b16 %v318
    %v365 = vunpack.c.h.b16 %v318
    %v366 = vunpack.c.l.b16 %v319
    %v367 = vunpack.c.h.b16 %v319
    %v368 = vunpack.c.l.b16 %v320
    %v369 = vunpack.c.h.b16 %v320
    %v370 = vunpack.c.l.b16 %v321
    %v371 = vunpack.c.h.b16 %v321
    %v372 = vunpack.c.l.b16 %v322
    %v373 = vunpack.c.h.b16 %v322
    %v374 = vunpack.c.l.b16 %v323
    %v375 = vunpack.c.h.b16 %v323
    %v376 = vunpack.c.l.b16 %v324
    %v377 = vunpack.c.h.b16 %v324
    %v378 = vunpack.c.l.b16 %v325
    %v379 = vunpack.c.h.b16 %v325
    %v380 = vpack.c.b16 %v350, %v348
    %v381 = vpack.c.b16 %v351, %v349
    %v382 = vpack.c.b16 %v354, %v352
    %v383 = vpack.c.b16 %v355, %v353
    %v384 = vpack.c.b16 %v358, %v356
    %v385 = vpack.c.b16 %v359, %v357
    %v386 = vpack.c.b16 %v362, %v360
    %v387 = vpack.c.b16 %v363, %v361
    %v388 = vpack.c.b16 %v366, %v364
    %v389 = vpack.c.b16 %v367, %v365
    %v390 = vpack.c.b16 %v370, %v368
    %v391 = vpack.c.b16 %v371, %v369
    %v392 = vpack.c.b16 %v374, %v372
    %v393 = vpack.c.b16 %v375, %v373
    %v394 = vpack.c.b16 %v378, %v376
    %v395 = vpack.c.b16 %v379, %v377
    %412 = vmatpush.bf16.msra.mxu0 %v394
    %413 = vmatpush.bf16.msra.mxu0 %v392
    %414 = vmatpush.bf16.msra.mxu0 %v390
    %415 = vmatpush.bf16.msra.mxu0 %v388
    %416 = vmatpush.bf16.msra.mxu0 %v386
    %417 = vmatpush.bf16.msra.mxu0 %v384
    %418 = vmatpush.bf16.msra.mxu0 %v382
    %419 = vmatpush.bf16.msra.mxu0 %v380
    %420 = vmatmul.bf16.gmra.mxu0 %v309
    %v421 = vpop.f32.mrf.mxu0
    %v422 = vadd.f32 %v328, %v421
    %v423 = vpop.f32.mrf.mxu0
    %424 = vdwg.mxu0
    %425 = vmatpush.bf16.msra.mxu0 %v395
    %426 = vmatpush.bf16.msra.mxu0 %v393
    %427 = vmatpush.bf16.msra.mxu0 %v391
    %428 = vmatpush.bf16.msra.mxu0 %v389
    %429 = vmatpush.bf16.msra.mxu0 %v387
    %430 = vmatpush.bf16.msra.mxu0 %v385
    %431 = vmatpush.bf16.msra.mxu0 %v383
    %432 = vmatpush.bf16.msra.mxu0 %v381
    %433 = vmatmul.bf16.gmra.mxu0 %v309
    %v434 = vpop.f32.mrf.mxu0
    %v435 = vadd.f32 %v329, %v434
    %v436 = vpop.f32.mrf.mxu0
    %437 = vdwg.mxu0
    %v438 = vmul.f32 %v435, 0.5
    %v439 = vmul.f32 %v438, 1.442695
    %v440 = vpow.pop %v439
    %v441 = vld [vmem:[%s7] sm:$0x1]
    %v443 = vperm.slane %v441, 0
    %v445 = vmul.f32 %v440, %v443
    %v446 = vadd.f32 %v422, %v445
    %v447 = vlaneseq
    %v448 = vand.u32 %v447, 127
    %vm449 = vcmp.lt.s32.totalorder %v448, 32
    %v450 = vsel %vm449, %v446, -inf
    %451 = vmax.xlane.f32.xlu0 %v450
    %v452 = vpop.xlane.xlu0 %451
    %v453 = vsub.f32 %v450, %v452
    %v454 = vmul.f32 %v453, 1.442695
    %v455 = vpow.pop %v454
    %456 = vadd.xlane.f32.xlu0 %v455
    %v457 = vpop.xlane.xlu0 %456
    %v458 = vrcp.pop %v457
    %v459 = vmul.f32 %v455, %v458
    %v460 = vpack.c.bf16 %v459, %v459
    %v461 = vld [vmem:[#allocation11] sm:$0xf]
    %v462 = vld [vmem:[#allocation11 + $0x4] sm:$0xf]
    %v463 = vld [vmem:[#allocation11 + $0x8] sm:$0xf]
    %v464 = vld [vmem:[#allocation11 + $0xc] sm:$0xf]
    %v465 = vld [vmem:[#allocation11 + $0x10] sm:$0xf]
    %v466 = vld [vmem:[#allocation11 + $0x14] sm:$0xf]
    %v467 = vld [vmem:[#allocation11 + $0x18] sm:$0xf]
    %v468 = vld [vmem:[#allocation11 + $0x1c] sm:$0xf]
    %v469 = vld [vmem:[#allocation11 + $0x20] sm:$0xf]
    %v470 = vld [vmem:[#allocation11 + $0x24] sm:$0xf]
    %v471 = vld [vmem:[#allocation11 + $0x28] sm:$0xf]
    %v472 = vld [vmem:[#allocation11 + $0x2c] sm:$0xf]
    %v473 = vld [vmem:[#allocation11 + $0x30] sm:$0xf]
    %v474 = vld [vmem:[#allocation11 + $0x34] sm:$0xf]
    %v475 = vld [vmem:[#allocation11 + $0x38] sm:$0xf]
    %v476 = vld [vmem:[#allocation11 + $0x3c] sm:$0xf]
    %v477 = vld [vmem:[%s9] sm:$0x1]
    %v479 = vperm.slane %v477, 0
    %v497 = vunpack.c.l.b16 %v461
    %v498 = vunpack.c.l.b16 %v462
    %v499 = vunpack.c.l.b16 %v463
    %v500 = vunpack.c.l.b16 %v464
    %v501 = vunpack.c.l.b16 %v465
    %v502 = vunpack.c.l.b16 %v466
    %v503 = vunpack.c.l.b16 %v467
    %v504 = vunpack.c.l.b16 %v468
    %v505 = vunpack.c.l.b16 %v469
    %v506 = vunpack.c.l.b16 %v470
    %v507 = vunpack.c.l.b16 %v471
    %v508 = vunpack.c.l.b16 %v472
    %v509 = vunpack.c.l.b16 %v473
    %v510 = vunpack.c.l.b16 %v474
    %v511 = vunpack.c.l.b16 %v475
    %v512 = vunpack.c.l.b16 %v476
    %v513 = vpack.c.b16 %v498, %v497
    %v514 = vpack.c.b16 %v500, %v499
    %v515 = vpack.c.b16 %v502, %v501
    %v516 = vpack.c.b16 %v504, %v503
    %v517 = vpack.c.b16 %v506, %v505
    %v518 = vpack.c.b16 %v508, %v507
    %v519 = vpack.c.b16 %v510, %v509
    %v520 = vpack.c.b16 %v512, %v511
    %529 = vmatpush.bf16.msra.mxu0 %v520
    %530 = vmatpush.bf16.msra.mxu0 %v519
    %531 = vmatpush.bf16.msra.mxu0 %v518
    %532 = vmatpush.bf16.msra.mxu0 %v517
    %533 = vmatpush.bf16.msra.mxu0 %v516
    %534 = vmatpush.bf16.msra.mxu0 %v515
    %535 = vmatpush.bf16.msra.mxu0 %v514
    %536 = vmatpush.bf16.msra.mxu0 %v513
    %537 = vmatmul.bf16.gmra.mxu0 %v460
    %v538 = vpop.f32.mrf.mxu0
    %v539 = vadd.f32 %v479, %v538
    %v540 = vpop.f32.mrf.mxu0
    %541 = vdwg.mxu0
    %542 = vmax.xlane.f32.xlu0 %v539
    %v543 = vpop.xlane.xlu0 %542
    %v544 = vsub.f32 %v539, %v543
    %v545 = vmul.f32 %v544, 1.442695
    %v546 = vpow.pop %v545
    %547 = vadd.xlane.f32.xlu0 %v546
    %v548 = vpop.xlane.xlu0 %547
    %v549 = vrcp.pop %v548
    %v550 = vmul.f32 %v546, %v549
    %551 = vst [vmem:[#allocation13] sm:$0xff] %v550
    // Predicated region
    $region66: #{tpu_custom_call.1} parent=1 // pred_check
      _
    $region67: #{tpu_custom_call.1} parent=1 // pred_check_branch
      %553 = sbr.rel (0) target = $region69
    $region68: #{tpu_custom_call.1} parent=1 // pred_region
      %555 = vsyncadd [#allocation4], 0
      %s557 = sshll.u32 [#allocation13], 4
      %s558 = int_to_ptr.vmem [resolvable:$true] %s557
      %s559 = sshll.u32 %s10, 4
      %s560 = int_to_ptr.hbm [resolvable:$true] %s559
      %562 = dma.vmem_to_hbm [thread:$0]  %s558, 128, %s560, [#allocation4]
    $region69: #{tpu_custom_call.1} parent=1 // pred_fallthru
      _
    // Predicated region
    $region70: #{tpu_custom_call.1} parent=1 // pred_check
      _
    $region71: #{tpu_custom_call.1} parent=1 // pred_check_branch
      %564 = sbr.rel (0) target = $region73
    $region72: #{tpu_custom_call.1} parent=1 // pred_region
      %566 = dma.done [#allocation4], 128
    $region73: #{tpu_custom_call.1} parent=1 // pred_fallthru
      _
    %567 = vsyncpa [#allocation3], 1
    %568 = vsyncpa [#allocation6], 1
    %569 = vsyncpa [#allocation9], 1
    %570 = vsyncpa [#allocation12], 1
    %571 = vsyncpa [#allocation4], 1

</llo_original>
